<compile_context>
chip_gen: v7x
topology: tpu7x:2x2x1
jax: 0.10.0
libtpu: 0.0.40
codegen_flags: <defaults>
</compile_context>

<pallas_src>
import jax
import jax.numpy as jnp
from jax.experimental import pallas as pl
from jax.experimental.pallas import tpu as pltpu

# ---- small shapes consistent with the module (bottleneck MLP) ----
B   = 8      # batch
IN  = 256    # in_dim     (stands in for 2048)
HID = 128    # hidden_dim (stands in for 512)
OUT = 256    # out_dim    (stands in for 768)
EPS = 1e-5   # BatchNorm1d default eps


# --------------------------------------------------------------------------
# Fused kernel: Linear1 -> BatchNorm1d(batch stats) -> ReLU -> Linear2
# Weights arrive pre-transposed: w1 is (IN, HID), w2 is (HID, OUT).
# --------------------------------------------------------------------------
def prediction_mlp_kernel(x_ref, w1_ref, b1_ref, g_ref, beta_ref,
                          w2_ref, b2_ref, o_ref):
    x = x_ref[...]                                                     # (B, IN)

    # ---- linear1: x @ W1 + b1 (MXU, f32 accumulate) ----
    h = jnp.dot(x, w1_ref[...], preferred_element_type=jnp.float32) + b1_ref[...]

    # ---- BatchNorm1d (training-mode batch stats, biased variance), one pass ----
    inv_b = jnp.float32(1.0 / h.shape[0])
    mean  = jnp.sum(h, axis=0, keepdims=True) * inv_b                  # (1, HID)
    mean2 = jnp.sum(h * h, axis=0, keepdims=True) * inv_b              # (1, HID)
    var   = mean2 - mean * mean                                        # (1, HID)
    scale = g_ref[...] * jax.lax.rsqrt(var + EPS)                      # EUP rsqrt
    shift = beta_ref[...] - mean * scale

    # ---- normalize + affine as one FMA, then ReLU ----
    h = jnp.maximum(h * scale + shift, 0.0)

    # ---- layer2: h @ W2 + b2 (no BN / ReLU on the output, per the paper) ----
    o_ref[...] = jnp.dot(h, w2_ref[...],
                         preferred_element_type=jnp.float32) + b2_ref[...]


# TODO(synk): BatchNorm1d running_mean/running_var buffer updates (momentum 0.1)
# are a stateful training side effect and are not produced by this kernel.
def prediction_mlp_forward(x, params):
    """Single fused pallas_call; whole problem resident in VMEM (no grid)."""
    vmem = pl.BlockSpec(memory_space=pltpu.MemorySpace.VMEM)
    return pl.pallas_call(
        prediction_mlp_kernel,
        out_shape=jax.ShapeDtypeStruct((x.shape[0], params["w2"].shape[1]),
                                       jnp.float32),
        in_specs=[vmem] * 7,
        out_specs=vmem,
    )(x, params["w1"], params["b1"], params["gamma"], params["beta"],
      params["w2"], params["b2"])


# --------------------------------------------------------------------------
# Pure-JAX reference (mirrors torch semantics) for a correctness check.
# --------------------------------------------------------------------------
def ref_forward(x, params):
    h = x @ params["w1"] + params["b1"]
    mu = jnp.mean(h, axis=0, keepdims=True)
    var = jnp.mean((h - mu) ** 2, axis=0, keepdims=True)
    h = (h - mu) * jax.lax.rsqrt(var + EPS) * params["gamma"] + params["beta"]
    h = jnp.maximum(h, 0.0)
    return h @ params["w2"] + params["b2"]


# --------------------------------------------------------------------------
# Deterministic parameter construction.
# Weights are stored PRE-TRANSPOSED as (in_features, out_features) so the
# kernel never transposes (PyTorch's (out, in) layout is only a storage
# convention; x @ W here equals x @ W_pt.T there).
# --------------------------------------------------------------------------
def init_params(key):
    def nxt():
        nonlocal key
        key, sub = jax.random.split(key)
        return sub

    def rnd(shape, scale=0.02):
        return scale * jax.random.normal(nxt(), shape, dtype=jnp.float32)

    return dict(
        w1=rnd((IN, HID)),                       # linear1.weight (pre-transposed)
        b1=rnd((1, HID)),                        # linear1.bias
        gamma=jnp.ones((1, HID), jnp.float32),   # bn1.weight
        beta=jnp.zeros((1, HID), jnp.float32),   # bn1.bias
        w2=rnd((HID, OUT)),                      # layer2.weight (pre-transposed)
        b2=rnd((1, OUT)),                        # layer2.bias
    )


if __name__ == "__main__":
    key = jax.random.PRNGKey(0)
    params = init_params(key)

    key, kx = jax.random.split(key)
    x = jax.random.normal(kx, (B, IN), dtype=jnp.float32)

    out = jax.block_until_ready(prediction_mlp_forward(x, params))
    ref = jax.block_until_ready(ref_forward(x, params))

    assert out.shape == (B, OUT), out.shape
    assert jnp.allclose(out, ref, atol=1e-2, rtol=1e-2), "mismatch vs reference"
    print("KERNEL_OK")
</pallas_src>

<mosaic_0001>
module attributes {stable_mosaic.version = 11 : i64} {
  func.func @prediction_mlp_kernel(%arg0: memref<8x256xf32, #tpu.memory_space<vmem>>, %arg1: memref<256x128xf32, #tpu.memory_space<vmem>>, %arg2: memref<1x128xf32, #tpu.memory_space<vmem>>, %arg3: memref<1x128xf32, #tpu.memory_space<vmem>>, %arg4: memref<1x128xf32, #tpu.memory_space<vmem>>, %arg5: memref<128x256xf32, #tpu.memory_space<vmem>>, %arg6: memref<1x256xf32, #tpu.memory_space<vmem>>, %arg7: memref<8x256xf32, #tpu.memory_space<vmem>>) attributes {dimension_semantics = [], scalar_prefetch = 0 : i64, scratch_operands = 0 : i64, tpu.core_type = #tpu.core_type<tc>} {
    %c0 = arith.constant 0 : index
    %c0_0 = arith.constant 0 : index
    %0 = vector.load %arg0[%c0, %c0_0] : memref<8x256xf32, #tpu.memory_space<vmem>>, vector<8x256xf32>
    %c0_1 = arith.constant 0 : index
    %c0_2 = arith.constant 0 : index
    %1 = vector.load %arg1[%c0_1, %c0_2] : memref<256x128xf32, #tpu.memory_space<vmem>>, vector<256x128xf32>
    %cst = arith.constant dense<0.000000e+00> : vector<8x128xf32>
    %2 = tpu.matmul %0, %1, %cst {dimension_numbers = #tpu.dot_dimension_numbers<[1], [0], [0], [1], [0, 0, 1, 1], [], []>} : vector<8x256xf32>, vector<256x128xf32>, vector<8x128xf32> -> vector<8x128xf32>
    %c0_3 = arith.constant 0 : index
    %c0_4 = arith.constant 0 : index
    %3 = vector.load %arg2[%c0_3, %c0_4] : memref<1x128xf32, #tpu.memory_space<vmem>>, vector<1x128xf32>
    %4 = vector.broadcast %3 : vector<1x128xf32> to vector<8x128xf32>
    %5 = arith.addf %2, %4 : vector<8x128xf32>
    %cst_5 = arith.constant dense<0.000000e+00> : vector<128xf32>
    %6 = vector.multi_reduction <add>, %5, %cst_5 [0] : vector<8x128xf32> to vector<128xf32>
    %7 = vector.shape_cast %6 : vector<128xf32> to vector<1x128xf32>
    %cst_6 = arith.constant 1.250000e-01 : f32
    %8 = vector.broadcast %cst_6 : f32 to vector<1x128xf32>
    %9 = arith.mulf %7, %8 : vector<1x128xf32>
    %10 = arith.mulf %5, %5 : vector<8x128xf32>
    %cst_7 = arith.constant dense<0.000000e+00> : vector<128xf32>
    %11 = vector.multi_reduction <add>, %10, %cst_7 [0] : vector<8x128xf32> to vector<128xf32>
    %12 = vector.shape_cast %11 : vector<128xf32> to vector<1x128xf32>
    %cst_8 = arith.constant 1.250000e-01 : f32
    %13 = vector.broadcast %cst_8 : f32 to vector<1x128xf32>
    %14 = arith.mulf %12, %13 : vector<1x128xf32>
    %15 = arith.mulf %9, %9 : vector<1x128xf32>
    %16 = arith.subf %14, %15 : vector<1x128xf32>
    %c0_9 = arith.constant 0 : index
    %c0_10 = arith.constant 0 : index
    %17 = vector.load %arg3[%c0_9, %c0_10] : memref<1x128xf32, #tpu.memory_space<vmem>>, vector<1x128xf32>
    %cst_11 = arith.constant 9.99999974E-6 : f32
    %18 = vector.broadcast %cst_11 : f32 to vector<1x128xf32>
    %19 = arith.addf %16, %18 : vector<1x128xf32>
    %20 = math.rsqrt %19 : vector<1x128xf32>
    %21 = arith.mulf %17, %20 : vector<1x128xf32>
    %c0_12 = arith.constant 0 : index
    %c0_13 = arith.constant 0 : index
    %22 = vector.load %arg4[%c0_12, %c0_13] : memref<1x128xf32, #tpu.memory_space<vmem>>, vector<1x128xf32>
    %23 = arith.mulf %9, %21 : vector<1x128xf32>
    %24 = arith.subf %22, %23 : vector<1x128xf32>
    %25 = vector.broadcast %21 : vector<1x128xf32> to vector<8x128xf32>
    %26 = arith.mulf %5, %25 : vector<8x128xf32>
    %27 = vector.broadcast %24 : vector<1x128xf32> to vector<8x128xf32>
    %28 = arith.addf %26, %27 : vector<8x128xf32>
    %cst_14 = arith.constant 0.000000e+00 : f32
    %29 = vector.broadcast %cst_14 : f32 to vector<8x128xf32>
    %30 = arith.maximumf %28, %29 : vector<8x128xf32>
    %c0_15 = arith.constant 0 : index
    %c0_16 = arith.constant 0 : index
    %31 = vector.load %arg5[%c0_15, %c0_16] : memref<128x256xf32, #tpu.memory_space<vmem>>, vector<128x256xf32>
    %cst_17 = arith.constant dense<0.000000e+00> : vector<8x256xf32>
    %32 = tpu.matmul %30, %31, %cst_17 {dimension_numbers = #tpu.dot_dimension_numbers<[1], [0], [0], [1], [0, 0, 1, 1], [], []>} : vector<8x128xf32>, vector<128x256xf32>, vector<8x256xf32> -> vector<8x256xf32>
    %c0_18 = arith.constant 0 : index
    %c0_19 = arith.constant 0 : index
    %33 = vector.load %arg6[%c0_18, %c0_19] : memref<1x256xf32, #tpu.memory_space<vmem>>, vector<1x256xf32>
    %34 = vector.broadcast %33 : vector<1x256xf32> to vector<8x256xf32>
    %35 = arith.addf %32, %34 : vector<8x256xf32>
    %c0_20 = arith.constant 0 : index
    %c0_21 = arith.constant 0 : index
    %36 = vector.load %arg7[%c0_20, %c0_21] : memref<8x256xf32, #tpu.memory_space<vmem>>, vector<8x256xf32>
    tpu.vector_store %arg7[%c0_20, %c0_21], %35 {strides = array<i32>} : memref<8x256xf32, #tpu.memory_space<vmem>>, vector<8x256xf32>,
    return
  }
}

</mosaic_0001>

<llo_original>
// kernel: tpu_custom_call.1
$region0: #{tpu_custom_call.1}
  #allocation0 [shape = 'u32[]', space=smem, size = 0x4, offset = 0x4, fixed_abs, tag = 'smem constant byte address 0x4 - core index']
  #allocation1 [shape = 'u32[144,128]{1,0:T(1,128)}', space=vmem, size = 0x12000, scoped, tag = 'internal scratch']
  %s0 = inlined_call_operand.hbm [shape: f32[8,256], index: 0, kind: input, shape index: {}]
  %s1 = inlined_call_operand.hbm [shape: f32[256,128], index: 1, kind: input, shape index: {}]
  %s2 = inlined_call_operand.vmem [shape: f32[1,128], index: 2, kind: input, shape index: {}]
  %s3 = inlined_call_operand.vmem [shape: f32[1,128], index: 3, kind: input, shape index: {}]
  %s4 = inlined_call_operand.vmem [shape: f32[1,128], index: 4, kind: input, shape index: {}]
  %s5 = inlined_call_operand.hbm [shape: f32[128,256], index: 5, kind: input, shape index: {}]
  %s6 = inlined_call_operand.vmem [shape: f32[1,256], index: 6, kind: input, shape index: {}]
  %s7 = inlined_call_operand.hbm [shape: f32[8,256], index: 7, kind: output, shape index: {}]
  %s8 = sld [smem:[#allocation0]]
  $region50: #{tpu_custom_call.1} parent=0
    _
  %s10 = ssub.s32 1, %s8
  %s11 = scalar_select 0, %s10, %s8
  $region1: #{tpu_custom_call.1} parent=0
    #allocation2 [shape = 'u8[8192]{0}', space=vmem, size = 0x2000, scoped, tag = 'input window, operand 0, single buffered']
    #allocation3 [shape = 's32[1]{0}', space=sflag, size = 0x4, scoped, tag = 'scoped memory for tpu_custom_call.1']
    #allocation4 [shape = 's32[1]{0}', space=sflag, size = 0x4, scoped, tag = 'scoped memory for tpu_custom_call.1']
    #allocation5 [shape = 'u8[131072]{0}', space=vmem, size = 0x20000, scoped, tag = 'input window, operand 1, single buffered']
    #allocation6 [shape = 's32[1]{0}', space=sflag, size = 0x4, scoped, tag = 'scoped memory for tpu_custom_call.1']
    #allocation7 [shape = 'u8[131072]{0}', space=vmem, size = 0x20000, scoped, tag = 'input window, operand 5, single buffered']
    #allocation8 [shape = 'u8[8192]{0}', space=vmem, size = 0x2000, scoped, tag = 'output window, operand 0, single buffered']
    %12 = vsyncpa [#allocation3], 0
    %13 = vsyncpa [#allocation6], 0
    %14 = vsyncpa [#allocation4], 0
    // Predicated region
    $region2: #{tpu_custom_call.1} parent=1 // pred_check
      _
    $region3: #{tpu_custom_call.1} parent=1 // pred_check_branch
      %16 = sbr.rel (0) target = $region5
    $region4: #{tpu_custom_call.1} parent=1 // pred_region
      %s18 = ssub.s32 256, 256
      %19 = vsyncadd [#allocation3], %s18
      %s21 = sshll.u32 [#allocation2], 4
      %s22 = int_to_ptr.vmem [resolvable:$true] %s21
      %24 = dma.hbm_to_vmem [thread:$0]  %s0, 256, %s22, [#allocation3]
    $region5: #{tpu_custom_call.1} parent=1 // pred_fallthru
      _
    // Predicated region
    $region6: #{tpu_custom_call.1} parent=1 // pred_check
      _
    $region7: #{tpu_custom_call.1} parent=1 // pred_check_branch
      %26 = sbr.rel (0) target = $region9
    $region8: #{tpu_custom_call.1} parent=1 // pred_region
      %s28 = ssub.s32 4096, 4096
      %29 = vsyncadd [#allocation6], %s28
      %s30 = sshll.u32 [#allocation5], 4
      %s31 = int_to_ptr.vmem [resolvable:$true] %s30
      %36 = dma.hbm_to_vmem [thread:$0]  %s1, 4096, %s31, [#allocation6], 128, 128, 8
    $region9: #{tpu_custom_call.1} parent=1 // pred_fallthru
      _
    // Predicated region
    $region10: #{tpu_custom_call.1} parent=1 // pred_check
      _
    $region11: #{tpu_custom_call.1} parent=1 // pred_check_branch
      %38 = sbr.rel (0) target = $region13
    $region12: #{tpu_custom_call.1} parent=1 // pred_region
      _
    $region13: #{tpu_custom_call.1} parent=1 // pred_fallthru
      _
    // Predicated region
    $region14: #{tpu_custom_call.1} parent=1 // pred_check
      _
    $region15: #{tpu_custom_call.1} parent=1 // pred_check_branch
      %40 = sbr.rel (0) target = $region17
    $region16: #{tpu_custom_call.1} parent=1 // pred_region
      _
    $region17: #{tpu_custom_call.1} parent=1 // pred_fallthru
      _
    // Predicated region
    $region18: #{tpu_custom_call.1} parent=1 // pred_check
      _
    $region19: #{tpu_custom_call.1} parent=1 // pred_check_branch
      %42 = sbr.rel (0) target = $region21
    $region20: #{tpu_custom_call.1} parent=1 // pred_region
      _
    $region21: #{tpu_custom_call.1} parent=1 // pred_fallthru
      _
    // Predicated region
    $region22: #{tpu_custom_call.1} parent=1 // pred_check
      _
    $region23: #{tpu_custom_call.1} parent=1 // pred_check_branch
      %44 = sbr.rel (0) target = $region25
    $region24: #{tpu_custom_call.1} parent=1 // pred_region
      %s46 = ssub.s32 4096, 4096
      %47 = vsyncadd [#allocation6], %s46
      %s48 = sshll.u32 [#allocation7], 4
      %s49 = int_to_ptr.vmem [resolvable:$true] %s48
      %54 = dma.hbm_to_vmem [thread:$0]  %s5, 4096, %s49, [#allocation6], 256, 256, 16
    $region25: #{tpu_custom_call.1} parent=1 // pred_fallthru
      _
    // Predicated region
    $region26: #{tpu_custom_call.1} parent=1 // pred_check
      _
    $region27: #{tpu_custom_call.1} parent=1 // pred_check_branch
      %56 = sbr.rel (0) target = $region29
    $region28: #{tpu_custom_call.1} parent=1 // pred_region
      _
    $region29: #{tpu_custom_call.1} parent=1 // pred_fallthru
      _
    // Predicated region
    $region30: #{tpu_custom_call.1} parent=1 // pred_check
      _
    $region31: #{tpu_custom_call.1} parent=1 // pred_check_branch
      %58 = sbr.rel (0) target = $region33
    $region32: #{tpu_custom_call.1} parent=1 // pred_region
      %59 = dma.done [#allocation3], 256
    $region33: #{tpu_custom_call.1} parent=1 // pred_fallthru
      _
    // Predicated region
    $region34: #{tpu_custom_call.1} parent=1 // pred_check
      _
    $region35: #{tpu_custom_call.1} parent=1 // pred_check_branch
      %61 = sbr.rel (0) target = $region37
    $region36: #{tpu_custom_call.1} parent=1 // pred_region
      %62 = dma.done [#allocation6], 4096
    $region37: #{tpu_custom_call.1} parent=1 // pred_fallthru
      _
    // Predicated region
    $region38: #{tpu_custom_call.1} parent=1 // pred_check
      _
    $region39: #{tpu_custom_call.1} parent=1 // pred_check_branch
      %64 = sbr.rel (0) target = $region41
    $region40: #{tpu_custom_call.1} parent=1 // pred_region
      %65 = dma.done [#allocation6], 4096
    $region41: #{tpu_custom_call.1} parent=1 // pred_fallthru
      _
    %v66 = vld [vmem:[#allocation2] sm:$0xff]
    %v67 = vld [vmem:[#allocation2 + $0x8] sm:$0xff]
    %v68 = vld [vmem:[#allocation5] sm:$0xff]
    %v69 = vld [vmem:[#allocation5 + $0x8] sm:$0xff]
    %v70 = vld [vmem:[#allocation5 + $0x10] sm:$0xff]
    %v71 = vld [vmem:[#allocation5 + $0x18] sm:$0xff]
    %v72 = vld [vmem:[#allocation5 + $0x20] sm:$0xff]
    %v73 = vld [vmem:[#allocation5 + $0x28] sm:$0xff]
    %v74 = vld [vmem:[#allocation5 + $0x30] sm:$0xff]
    %v75 = vld [vmem:[#allocation5 + $0x38] sm:$0xff]
    %v76 = vld [vmem:[#allocation5 + $0x40] sm:$0xff]
    %v77 = vld [vmem:[#allocation5 + $0x48] sm:$0xff]
    %v78 = vld [vmem:[#allocation5 + $0x50] sm:$0xff]
    %v79 = vld [vmem:[#allocation5 + $0x58] sm:$0xff]
    %v80 = vld [vmem:[#allocation5 + $0x60] sm:$0xff]
    %v81 = vld [vmem:[#allocation5 + $0x68] sm:$0xff]
    %v82 = vld [vmem:[#allocation5 + $0x70] sm:$0xff]
    %v83 = vld [vmem:[#allocation5 + $0x78] sm:$0xff]
    %v84 = vld [vmem:[#allocation5 + $0x80] sm:$0xff]
    %v85 = vld [vmem:[#allocation5 + $0x88] sm:$0xff]
    %v86 = vld [vmem:[#allocation5 + $0x90] sm:$0xff]
    %v87 = vld [vmem:[#allocation5 + $0x98] sm:$0xff]
    %v88 = vld [vmem:[#allocation5 + $0xa0] sm:$0xff]
    %v89 = vld [vmem:[#allocation5 + $0xa8] sm:$0xff]
    %v90 = vld [vmem:[#allocation5 + $0xb0] sm:$0xff]
    %v91 = vld [vmem:[#allocation5 + $0xb8] sm:$0xff]
    %v92 = vld [vmem:[#allocation5 + $0xc0] sm:$0xff]
    %v93 = vld [vmem:[#allocation5 + $0xc8] sm:$0xff]
    %v94 = vld [vmem:[#allocation5 + $0xd0] sm:$0xff]
    %v95 = vld [vmem:[#allocation5 + $0xd8] sm:$0xff]
    %v96 = vld [vmem:[#allocation5 + $0xe0] sm:$0xff]
    %v97 = vld [vmem:[#allocation5 + $0xe8] sm:$0xff]
    %v98 = vld [vmem:[#allocation5 + $0xf0] sm:$0xff]
    %v99 = vld [vmem:[#allocation5 + $0xf8] sm:$0xff]
    %v100 = vld [vmem:[%s2] sm:$0x1]
    %v102 = vlaneseq
    %v103 = vshrl.u32 %v102, 7
    %v104 = vsub.s32 0, %v103
    %v105 = vrot.slane %v100, %v104
    %107 = vmatprep.subr.mxu0 0.0
    %108 = vmatpush1.msra.mxu0 %v68
    %109 = vmatprep.subr.mxu0 0.0
    %110 = vmatpush1.msra.mxu0 %v69
    %111 = vmatprep.subr.mxu0 0.0
    %112 = vmatpush1.msra.mxu0 %v70
    %113 = vmatprep.subr.mxu0 0.0
    %114 = vmatpush1.msra.mxu0 %v71
    %115 = vmatprep.subr.mxu0 0.0
    %116 = vmatpush1.msra.mxu0 %v72
    %117 = vmatprep.subr.mxu0 0.0
    %118 = vmatpush1.msra.mxu0 %v73
    %119 = vmatprep.subr.mxu0 0.0
    %120 = vmatpush1.msra.mxu0 %v74
    %121 = vmatprep.subr.mxu0 0.0
    %122 = vmatpush1.msra.mxu0 %v75
    %123 = vmatprep.subr.mxu0 0.0
    %124 = vmatpush1.msra.mxu0 %v76
    %125 = vmatprep.subr.mxu0 0.0
    %126 = vmatpush1.msra.mxu0 %v77
    %127 = vmatprep.subr.mxu0 0.0
    %128 = vmatpush1.msra.mxu0 %v78
    %129 = vmatprep.subr.mxu0 0.0
    %130 = vmatpush1.msra.mxu0 %v79
    %131 = vmatprep.subr.mxu0 0.0
    %132 = vmatpush1.msra.mxu0 %v80
    %133 = vmatprep.subr.mxu0 0.0
    %134 = vmatpush1.msra.mxu0 %v81
    %135 = vmatprep.subr.mxu0 0.0
    %136 = vmatpush1.msra.mxu0 %v82
    %137 = vmatprep.subr.mxu0 0.0
    %138 = vmatpush1.msra.mxu0 %v83
    %139 = vmatprep.subr.mxu0 0.0
    %140 = vmatpush1.msra.mxu0 %v84
    %141 = vmatprep.subr.mxu0 0.0
    %142 = vmatpush1.msra.mxu0 %v85
    %143 = vmatprep.subr.mxu0 0.0
    %144 = vmatpush1.msra.mxu0 %v86
    %145 = vmatprep.subr.mxu0 0.0
    %146 = vmatpush1.msra.mxu0 %v87
    %147 = vmatprep.subr.mxu0 0.0
    %148 = vmatpush1.msra.mxu0 %v88
    %149 = vmatprep.subr.mxu0 0.0
    %150 = vmatpush1.msra.mxu0 %v89
    %151 = vmatprep.subr.mxu0 0.0
    %152 = vmatpush1.msra.mxu0 %v90
    %153 = vmatprep.subr.mxu0 0.0
    %154 = vmatpush1.msra.mxu0 %v91
    %155 = vmatprep.subr.mxu0 0.0
    %156 = vmatpush1.msra.mxu0 %v92
    %157 = vmatprep.subr.mxu0 0.0
    %158 = vmatpush1.msra.mxu0 %v93
    %159 = vmatprep.subr.mxu0 0.0
    %160 = vmatpush1.msra.mxu0 %v94
    %161 = vmatprep.subr.mxu0 0.0
    %162 = vmatpush1.msra.mxu0 %v95
    %163 = vmatprep.subr.mxu0 0.0
    %164 = vmatpush1.msra.mxu0 %v96
    %165 = vmatprep.subr.mxu0 0.0
    %166 = vmatpush1.msra.mxu0 %v97
    %167 = vmatprep.subr.mxu0 0.0
    %168 = vmatpush1.msra.mxu0 %v98
    %169 = vmatprep.subr.mxu0 0.0
    %170 = vmatpush1.msra.mxu0 %v99
    %171 = vmatprep.mubr.f32.mxu0 %v67
    %172 = vmatmul.mubr.f32.gmra.mrb[0].mxu0 %v66
    %v173 = vpop.f32.mrb[0].mxu0
    %v174 = vadd.f32 %v105, %v173
    %v175 = vpop.f32.mrb[0].mxu0
    %176 = vdwg.mxu0
    %v177 = vrot.slane %v174, 4
    %v178 = vadd.f32 %v174, %v177
    %v179 = vrot.slane %v178, 2
    %v180 = vadd.f32 %v178, %v179
    %v181 = vrot.slane %v180, 1
    %v182 = vadd.f32 %v180, %v181
    %v183 = vmul.f32 %v182, 0.125
    %v184 = vmul.f32 %v174, %v174
    %v185 = vrot.slane %v184, 4
    %v186 = vadd.f32 %v184, %v185
    %v187 = vrot.slane %v186, 2
    %v188 = vadd.f32 %v186, %v187
    %v189 = vrot.slane %v188, 1
    %v190 = vadd.f32 %v188, %v189
    %v191 = vmul.f32 %v190, 0.125
    %v192 = vmul.f32 %v183, %v183
    %v193 = vsub.f32 %v191, %v192
    %v194 = vld [vmem:[%s3] sm:$0x1]
    %v195 = vadd.f32 %v193, 1e-05
    %v196 = vrsqrt.pop %v195
    %v197 = vmul.f32 %v194, %v196
    %v198 = vld [vmem:[%s4] sm:$0x1]
    %v199 = vmul.f32 %v183, %v197
    %v200 = vsub.f32 %v198, %v199
    %v202 = vlaneseq
    %v203 = vshrl.u32 %v202, 7
    %v204 = vsub.s32 0, %v203
    %v205 = vrot.slane %v197, %v204
    %v207 = vmul.f32 %v174, %v205
    %v209 = vlaneseq
    %v210 = vshrl.u32 %v209, 7
    %v211 = vsub.s32 0, %v210
    %v212 = vrot.slane %v200, %v211
    %v214 = vadd.f32 %v207, %v212
    %v215 = vmax.f32 %v214, 0.0
    %v216 = vld [vmem:[#allocation7] sm:$0xff]
    %v217 = vld [vmem:[#allocation7 + $0x8] sm:$0xff]
    %v218 = vld [vmem:[#allocation7 + $0x10] sm:$0xff]
    %v219 = vld [vmem:[#allocation7 + $0x18] sm:$0xff]
    %v220 = vld [vmem:[#allocation7 + $0x20] sm:$0xff]
    %v221 = vld [vmem:[#allocation7 + $0x28] sm:$0xff]
    %v222 = vld [vmem:[#allocation7 + $0x30] sm:$0xff]
    %v223 = vld [vmem:[#allocation7 + $0x38] sm:$0xff]
    %v224 = vld [vmem:[#allocation7 + $0x40] sm:$0xff]
    %v225 = vld [vmem:[#allocation7 + $0x48] sm:$0xff]
    %v226 = vld [vmem:[#allocation7 + $0x50] sm:$0xff]
    %v227 = vld [vmem:[#allocation7 + $0x58] sm:$0xff]
    %v228 = vld [vmem:[#allocation7 + $0x60] sm:$0xff]
    %v229 = vld [vmem:[#allocation7 + $0x68] sm:$0xff]
    %v230 = vld [vmem:[#allocation7 + $0x70] sm:$0xff]
    %v231 = vld [vmem:[#allocation7 + $0x78] sm:$0xff]
    %v232 = vld [vmem:[#allocation7 + $0x80] sm:$0xff]
    %v233 = vld [vmem:[#allocation7 + $0x88] sm:$0xff]
    %v234 = vld [vmem:[#allocation7 + $0x90] sm:$0xff]
    %v235 = vld [vmem:[#allocation7 + $0x98] sm:$0xff]
    %v236 = vld [vmem:[#allocation7 + $0xa0] sm:$0xff]
    %v237 = vld [vmem:[#allocation7 + $0xa8] sm:$0xff]
    %v238 = vld [vmem:[#allocation7 + $0xb0] sm:$0xff]
    %v239 = vld [vmem:[#allocation7 + $0xb8] sm:$0xff]
    %v240 = vld [vmem:[#allocation7 + $0xc0] sm:$0xff]
    %v241 = vld [vmem:[#allocation7 + $0xc8] sm:$0xff]
    %v242 = vld [vmem:[#allocation7 + $0xd0] sm:$0xff]
    %v243 = vld [vmem:[#allocation7 + $0xd8] sm:$0xff]
    %v244 = vld [vmem:[#allocation7 + $0xe0] sm:$0xff]
    %v245 = vld [vmem:[#allocation7 + $0xe8] sm:$0xff]
    %v246 = vld [vmem:[#allocation7 + $0xf0] sm:$0xff]
    %v247 = vld [vmem:[#allocation7 + $0xf8] sm:$0xff]
    %v248 = vld [vmem:[%s6] sm:$0x3]
    %v250 = vlaneseq
    %v251 = vshrl.u32 %v250, 7
    %v252 = vsub.s32 0, %v251
    %v253 = vrot.slane %v248, %v252
    %v254 = vlaneseq
    %v255 = vshrl.u32 %v254, 7
    %v256 = vsub.s32 1, %v255
    %v257 = vrot.slane %v248, %v256
    %260 = vmatprep.subr.mxu0 %v217
    %261 = vmatpush1.msra.mxu0 %v216
    %262 = vmatprep.subr.mxu0 %v219
    %263 = vmatpush1.msra.mxu0 %v218
    %264 = vmatprep.subr.mxu0 %v221
    %265 = vmatpush1.msra.mxu0 %v220
    %266 = vmatprep.subr.mxu0 %v223
    %267 = vmatpush1.msra.mxu0 %v222
    %268 = vmatprep.subr.mxu0 %v225
    %269 = vmatpush1.msra.mxu0 %v224
    %270 = vmatprep.subr.mxu0 %v227
    %271 = vmatpush1.msra.mxu0 %v226
    %272 = vmatprep.subr.mxu0 %v229
    %273 = vmatpush1.msra.mxu0 %v228
    %274 = vmatprep.subr.mxu0 %v231
    %275 = vmatpush1.msra.mxu0 %v230
    %276 = vmatprep.subr.mxu0 %v233
    %277 = vmatpush1.msra.mxu0 %v232
    %278 = vmatprep.subr.mxu0 %v235
    %279 = vmatpush1.msra.mxu0 %v234
    %280 = vmatprep.subr.mxu0 %v237
    %281 = vmatpush1.msra.mxu0 %v236
    %282 = vmatprep.subr.mxu0 %v239
    %283 = vmatpush1.msra.mxu0 %v238
    %284 = vmatprep.subr.mxu0 %v241
    %285 = vmatpush1.msra.mxu0 %v240
    %286 = vmatprep.subr.mxu0 %v243
    %287 = vmatpush1.msra.mxu0 %v242
    %288 = vmatprep.subr.mxu0 %v245
    %289 = vmatpush1.msra.mxu0 %v244
    %290 = vmatprep.subr.mxu0 %v247
    %291 = vmatpush1.msra.mxu0 %v246
    %292 = vmatprep.subr.mxu0 0.0
    %293 = vmatpush1.msra.mxu0 0.0
    %294 = vmatprep.subr.mxu0 0.0
    %295 = vmatpush1.msra.mxu0 0.0
    %296 = vmatprep.subr.mxu0 0.0
    %297 = vmatpush1.msra.mxu0 0.0
    %298 = vmatprep.subr.mxu0 0.0
    %299 = vmatpush1.msra.mxu0 0.0
    %300 = vmatprep.subr.mxu0 0.0
    %301 = vmatpush1.msra.mxu0 0.0
    %302 = vmatprep.subr.mxu0 0.0
    %303 = vmatpush1.msra.mxu0 0.0
    %304 = vmatprep.subr.mxu0 0.0
    %305 = vmatpush1.msra.mxu0 0.0
    %306 = vmatprep.subr.mxu0 0.0
    %307 = vmatpush1.msra.mxu0 0.0
    %308 = vmatprep.subr.mxu0 0.0
    %309 = vmatpush1.msra.mxu0 0.0
    %310 = vmatprep.subr.mxu0 0.0
    %311 = vmatpush1.msra.mxu0 0.0
    %312 = vmatprep.subr.mxu0 0.0
    %313 = vmatpush1.msra.mxu0 0.0
    %314 = vmatprep.subr.mxu0 0.0
    %315 = vmatpush1.msra.mxu0 0.0
    %316 = vmatprep.subr.mxu0 0.0
    %317 = vmatpush1.msra.mxu0 0.0
    %318 = vmatprep.subr.mxu0 0.0
    %319 = vmatpush1.msra.mxu0 0.0
    %320 = vmatprep.subr.mxu0 0.0
    %321 = vmatpush1.msra.mxu0 0.0
    %322 = vmatprep.subr.mxu0 0.0
    %323 = vmatpush1.msra.mxu0 0.0
    %324 = vmatprep.mubr.f32.mxu0 0.0
    %325 = vmatmul.mubr.f32.gmra.mrb[0].mxu0 %v215
    %v326 = vpop.f32.mrb[0].mxu0
    %v327 = vadd.f32 %v253, %v326
    %v328 = vpop.f32.mrb[0].mxu0
    %v329 = vadd.f32 %v257, %v328
    %330 = vdwg.mxu0
    %331 = vst [vmem:[#allocation8] sm:$0xff] %v327
    %332 = vst [vmem:[#allocation8 + $0x8] sm:$0xff] %v329
    // Predicated region
    $region42: #{tpu_custom_call.1} parent=1 // pred_check
      _
    $region43: #{tpu_custom_call.1} parent=1 // pred_check_branch
      %334 = sbr.rel (0) target = $region45
    $region44: #{tpu_custom_call.1} parent=1 // pred_region
      %s336 = ssub.s32 256, 256
      %337 = vsyncadd [#allocation4], %s336
      %s339 = sshll.u32 [#allocation8], 4
      %s340 = int_to_ptr.vmem [resolvable:$true] %s339
      %342 = dma.vmem_to_hbm [thread:$0]  %s340, 256, %s7, [#allocation4]
    $region45: #{tpu_custom_call.1} parent=1 // pred_fallthru
      _
    // Predicated region
    $region46: #{tpu_custom_call.1} parent=1 // pred_check
      _
    $region47: #{tpu_custom_call.1} parent=1 // pred_check_branch
      %344 = sbr.rel (0) target = $region49
    $region48: #{tpu_custom_call.1} parent=1 // pred_region
      %345 = dma.done [#allocation4], 256
    $region49: #{tpu_custom_call.1} parent=1 // pred_fallthru
      _
    %346 = vsyncpa [#allocation3], 1
    %347 = vsyncpa [#allocation6], 1
    %348 = vsyncpa [#allocation4], 1

</llo_original>
